<compile_context>
chip_gen: v6e
topology: v6e:2x2x1
jax: 0.10.0
libtpu: 0.0.40
codegen_flags: <defaults>
</compile_context>

<pallas_src>
import functools
import math

import jax
import jax.numpy as jnp
from jax.experimental import pallas as pl
from jax.experimental.pallas import tpu as pltpu


def _round_up(x, m):
    return ((x + m - 1) // m) * m


# ---------------------------------------------------------------------------
# Fused scatter / rowsum / normalize kernel
# ---------------------------------------------------------------------------
def _gat_scatter_kernel(row_ref, ee_ref, hj_ref, out_ref, *, tn, f_out):
    """One (head, N-tile, E-tile) grid step.

    row_ref : [1, TE]  int32   destination node index per edge (padded)
    ee_ref  : [1, TE]  f32     per-edge attention weight exp(-leaky(score))
    hj_ref  : [TE, Fp] f32     gathered source features, col f_out == 1.0
    out_ref : [TN, Fp] f32     accumulated output (resident across E tiles)
    """
    n_idx = pl.program_id(1)
    e_idx = pl.program_id(2)

    @pl.when(e_idx == 0)
    def _init():
        out_ref[...] = jnp.zeros_like(out_ref)

    te = row_ref.shape[1]
    row = row_ref[...]                                           # [1, TE]
    ee = ee_ref[...]                                             # [1, TE]
    node_ids = n_idx * tn + jax.lax.broadcasted_iota(jnp.int32, (tn, te), 0)
    # Scatter matrix tile with edge_e folded in (zero for padded edges).
    a_tile = jnp.where(node_ids == row, ee, jnp.float32(0.0))    # [TN, TE]
    out_ref[...] += jnp.dot(a_tile, hj_ref[...],
                            preferred_element_type=jnp.float32)

    @pl.when(e_idx == pl.num_programs(2) - 1)
    def _finalize():
        acc = out_ref[...]
        rowsum = acc[:, f_out:f_out + 1]                         # [TN, 1]
        out_ref[...] = acc / rowsum


# ---------------------------------------------------------------------------
# Forward wrapper (glue in plain JAX, hot path in Pallas)
# ---------------------------------------------------------------------------
def kecg_gat_forward(x, edge, w, a_src_dst, *, diag=True, bias=None,
                     attn_dropout=0.0):
    """Forward of KECGMultiHeadGraphAttention.

    x         : [N, f_in]            node features
    edge      : [2, E] int32         (row = destination, col = source)
    w         : [H, 1, f_out] (diag) or [H, f_in, f_out]
    a_src_dst : [H, 2*f_out, 1]
    returns   : [H, N, f_out]
    """
    del attn_dropout  # TODO(synk): stochastic F.dropout on edge_e (p=0 here).
    n_head = w.shape[0]
    f_out = w.shape[-1]
    N = x.shape[0]
    E = edge.shape[1]

    # per-head transformed features h (tiny; plain XLA)
    if diag:
        h = x[None, :, :] * w                                    # [H, N, F]
    else:
        h = jnp.einsum('nf,hfo->hno', x, w,
                       precision=jax.lax.Precision.HIGHEST)

    # per-node attention scores:  edge_h @ a  ==  s_src[row] + s_dst[col]
    a_src = a_src_dst[:, :f_out, 0]                              # [H, F]
    a_dst = a_src_dst[:, f_out:, 0]                              # [H, F]
    s_src = jnp.sum(h * a_src[:, None, :], axis=-1)              # [H, N]
    s_dst = jnp.sum(h * a_dst[:, None, :], axis=-1)              # [H, N]

    row = edge[0].astype(jnp.int32)
    col = edge[1].astype(jnp.int32)
    score = s_src[:, row] + s_dst[:, col]                        # [H, E]
    edge_e = jnp.exp(-jax.nn.leaky_relu(score, 0.2))             # [H, E]

    h_j = h[:, col, :]                                           # [H, E, F]

    # ---- pad / tile for the Pallas kernel ----
    TN = min(_round_up(max(N, 8), 8), 256)
    TE = min(_round_up(max(E, 128), 128), 512)
    N_pad = _round_up(N, TN)
    E_pad = _round_up(E, TE)
    F_pad = _round_up(f_out + 1, 128)       # lane-dense output; +1 = rowsum col

    hj_aug = jnp.zeros((n_head, E_pad, F_pad), jnp.float32)
    hj_aug = hj_aug.at[:, :E, :f_out].set(h_j)
    hj_aug = hj_aug.at[:, :E, f_out].set(1.0)        # ones column -> e_rowsum

    ee_pad = jnp.zeros((n_head, 1, E_pad), jnp.float32)
    ee_pad = ee_pad.at[:, 0, :E].set(edge_e)         # padded edges weight 0
    row_pad = jnp.zeros((1, E_pad), jnp.int32)
    row_pad = row_pad.at[0, :E].set(row)

    grid = (n_head, N_pad // TN, E_pad // TE)
    kernel = functools.partial(_gat_scatter_kernel, tn=TN, f_out=f_out)

    out_pad = pl.pallas_call(
        kernel,
        out_shape=jax.ShapeDtypeStruct((n_head, N_pad, F_pad), jnp.float32),
        grid_spec=pltpu.PrefetchScalarGridSpec(
            num_scalar_prefetch=0,
            grid=grid,
            in_specs=[
                pl.BlockSpec((1, TE), lambda hh, nn, ee: (0, ee)),
                pl.BlockSpec((None, 1, TE), lambda hh, nn, ee: (hh, 0, ee)),
                pl.BlockSpec((None, TE, F_pad), lambda hh, nn, ee: (hh, ee, 0)),
            ],
            out_specs=pl.BlockSpec((None, TN, F_pad),
                                   lambda hh, nn, ee: (hh, nn, 0)),
        ),
        compiler_params=pltpu.CompilerParams(
            dimension_semantics=("parallel", "parallel", "arbitrary"),
            vmem_limit_bytes=32 * 1024 * 1024,
        ),
    )(row_pad, ee_pad, hj_aug)

    out = out_pad[:, :N, :f_out]
    if bias is not None:
        out = out + bias
    return out


# ---------------------------------------------------------------------------
# pure-JAX reference (mirrors the PyTorch forward) for a correctness check
# ---------------------------------------------------------------------------
def _ref_forward(x, edge, w, a_src_dst, diag=True, bias=None):
    N = x.shape[0]
    outs = []
    for i in range(w.shape[0]):
        h = x * w[i] if diag else x @ w[i]
        edge_h = jnp.concatenate([h[edge[0]], h[edge[1]]], axis=1)   # [E, 2F]
        score = jnp.sum(edge_h * a_src_dst[i][:, 0][None, :], axis=1)
        edge_e = jnp.exp(-jax.nn.leaky_relu(score, 0.2))
        e_rowsum = jax.ops.segment_sum(edge_e, edge[0], num_segments=N)
        h_prime = jax.ops.segment_sum(edge_e[:, None] * h[edge[1]],
                                      edge[0], num_segments=N)
        h_prime = h_prime / e_rowsum[:, None]
        outs.append(h_prime[None])
    out = jnp.concatenate(outs, axis=0)
    if bias is not None:
        out = out + bias
    return out


# ---------------------------------------------------------------------------
# main
# ---------------------------------------------------------------------------
if __name__ == "__main__":
    n_head, N, f_out, E = 2, 24, 32, 64    # diag=True -> f_in == f_out

    key = jax.random.PRNGKey(0)
    k1, k2, k3, k4, k5 = jax.random.split(key, 5)

    x = jax.random.normal(k1, (N, f_out), dtype=jnp.float32)
    w = jax.random.normal(k2, (n_head, 1, f_out), dtype=jnp.float32)
    stdv = 1.0 / math.sqrt(2 * f_out)
    a_src_dst = jax.random.uniform(k3, (n_head, 2 * f_out, 1),
                                   dtype=jnp.float32, minval=-stdv, maxval=stdv)

    # edges: make sure every node has >= 1 incoming edge so e_rowsum > 0
    # (matches KECG usage, where the adjacency includes self connections).
    rows_extra = jax.random.randint(k4, (E - N,), 0, N, dtype=jnp.int32)
    rows = jnp.concatenate([jnp.arange(N, dtype=jnp.int32), rows_extra])
    cols = jax.random.randint(k5, (E,), 0, N, dtype=jnp.int32)
    edge = jnp.stack([rows, cols])

    out = kecg_gat_forward(x, edge, w, a_src_dst, diag=True, bias=None)
    jax.block_until_ready(out)

    ref = _ref_forward(x, edge, w, a_src_dst, diag=True, bias=None)
    assert out.shape == (n_head, N, f_out)
    assert jnp.allclose(out, ref, atol=1e-4, rtol=1e-4), \
        float(jnp.max(jnp.abs(out - ref)))

    print("KERNEL_OK")
</pallas_src>

<mosaic_0001>
module attributes {stable_mosaic.version = 11 : i64} {
  func.func @_gat_scatter_kernel(%arg0: i32, %arg1: i32, %arg2: i32, %arg3: memref<1x128xi32, #tpu.memory_space<vmem>>, %arg4: memref<1x1x128xf32, #tpu.memory_space<vmem>>, %arg5: memref<1x128x128xf32, #tpu.memory_space<vmem>>, %arg6: memref<1x24x128xf32, #tpu.memory_space<vmem>>) attributes {dimension_semantics = [#tpu.dimension_semantics<parallel>, #tpu.dimension_semantics<parallel>, #tpu.dimension_semantics<arbitrary>], iteration_bounds = array<i64: 2, 1, 1>, scalar_prefetch = 0 : i64, scratch_operands = 0 : i64, tpu.core_type = #tpu.core_type<tc>, window_params = [{transform_indices = @transform_0, window_bounds = array<i64: 1, 128>}, {transform_indices = @transform_1, window_bounds = array<i64: 1, 1, 128>}, {transform_indices = @transform_2, window_bounds = array<i64: 1, 128, 128>}, {transform_indices = @transform_3, window_bounds = array<i64: 1, 24, 128>}]} {
    %c0_i32 = arith.constant 0 : i32
    %0 = arith.cmpi eq, %arg2, %c0_i32 : i32
    %1 = arith.extui %0 : i1 to i32
    %c0_i32_0 = arith.constant 0 : i32
    %2 = arith.cmpi ne, %1, %c0_i32_0 : i32
    scf.if %2 {
      %cst_17 = arith.constant 0.000000e+00 : f32
      %28 = vector.broadcast %cst_17 : f32 to vector<24x128xf32>
      %c0_18 = arith.constant 0 : index
      %c0_19 = arith.constant 0 : index
      %c0_20 = arith.constant 0 : index
      %29 = vector.load %arg6[%c0_18, %c0_19, %c0_20] : memref<1x24x128xf32, #tpu.memory_space<vmem>>, vector<1x24x128xf32>
      %30 = vector.shape_cast %29 : vector<1x24x128xf32> to vector<24x128xf32>
      %31 = vector.shape_cast %28 : vector<24x128xf32> to vector<1x24x128xf32>
      tpu.vector_store %arg6[%c0_18, %c0_19, %c0_20], %31 {strides = array<i32>} : memref<1x24x128xf32, #tpu.memory_space<vmem>>, vector<1x24x128xf32>,
    } else {
    }
    %c0 = arith.constant 0 : index
    %c0_1 = arith.constant 0 : index
    %3 = vector.load %arg3[%c0, %c0_1] : memref<1x128xi32, #tpu.memory_space<vmem>>, vector<1x128xi32>
    %c0_2 = arith.constant 0 : index
    %c0_3 = arith.constant 0 : index
    %c0_4 = arith.constant 0 : index
    %4 = vector.load %arg4[%c0_2, %c0_3, %c0_4] : memref<1x1x128xf32, #tpu.memory_space<vmem>>, vector<1x1x128xf32>
    %5 = vector.shape_cast %4 : vector<1x1x128xf32> to vector<1x128xf32>
    %c24_i32 = arith.constant 24 : i32
    %6 = arith.muli %arg1, %c24_i32 : i32
    %7 = tpu.iota {dimensions = array<i32: 0>} : vector<24x128xi32>
    %8 = vector.broadcast %6 : i32 to vector<24x128xi32>
    %9 = arith.addi %8, %7 : vector<24x128xi32>
    %10 = vector.broadcast %3 : vector<1x128xi32> to vector<24x128xi32>
    %11 = arith.cmpi eq, %9, %10 : vector<24x128xi32>
    %cst = arith.constant 0.000000e+00 : f32
    %12 = vector.shape_cast %5 : vector<1x128xf32> to vector<1x128xf32>
    %13 = vector.broadcast %12 : vector<1x128xf32> to vector<24x128xf32>
    %14 = vector.broadcast %cst : f32 to vector<24x128xf32>
    %15 = arith.select %11, %13, %14 : vector<24x128xi1>, vector<24x128xf32>
    %c0_5 = arith.constant 0 : index
    %c0_6 = arith.constant 0 : index
    %c0_7 = arith.constant 0 : index
    %16 = vector.load %arg6[%c0_5, %c0_6, %c0_7] : memref<1x24x128xf32, #tpu.memory_space<vmem>>, vector<1x24x128xf32>
    %17 = vector.shape_cast %16 : vector<1x24x128xf32> to vector<24x128xf32>
    %c0_8 = arith.constant 0 : index
    %c0_9 = arith.constant 0 : index
    %c0_10 = arith.constant 0 : index
    %18 = vector.load %arg5[%c0_8, %c0_9, %c0_10] : memref<1x128x128xf32, #tpu.memory_space<vmem>>, vector<1x128x128xf32>
    %19 = vector.shape_cast %18 : vector<1x128x128xf32> to vector<128x128xf32>
    %cst_11 = arith.constant dense<0.000000e+00> : vector<24x128xf32>
    %20 = tpu.matmul %15, %19, %cst_11 {dimension_numbers = #tpu.dot_dimension_numbers<[1], [0], [0], [1], [0, 0, 1, 1], [], []>} : vector<24x128xf32>, vector<128x128xf32>, vector<24x128xf32> -> vector<24x128xf32>
    %21 = arith.addf %17, %20 : vector<24x128xf32>
    %c0_12 = arith.constant 0 : index
    %c0_13 = arith.constant 0 : index
    %c0_14 = arith.constant 0 : index
    %22 = vector.load %arg6[%c0_12, %c0_13, %c0_14] : memref<1x24x128xf32, #tpu.memory_space<vmem>>, vector<1x24x128xf32>
    %23 = vector.shape_cast %22 : vector<1x24x128xf32> to vector<24x128xf32>
    %24 = vector.shape_cast %21 : vector<24x128xf32> to vector<1x24x128xf32>
    tpu.vector_store %arg6[%c0_12, %c0_13, %c0_14], %24 {strides = array<i32>} : memref<1x24x128xf32, #tpu.memory_space<vmem>>, vector<1x24x128xf32>,
    %c0_i32_15 = arith.constant 0 : i32
    %25 = arith.cmpi eq, %arg2, %c0_i32_15 : i32
    %26 = arith.extui %25 : i1 to i32
    %c0_i32_16 = arith.constant 0 : i32
    %27 = arith.cmpi ne, %26, %c0_i32_16 : i32
    scf.if %27 {
      %c0_17 = arith.constant 0 : index
      %c0_18 = arith.constant 0 : index
      %c0_19 = arith.constant 0 : index
      %28 = vector.load %arg6[%c0_17, %c0_18, %c0_19] : memref<1x24x128xf32, #tpu.memory_space<vmem>>, vector<1x24x128xf32>
      %29 = vector.shape_cast %28 : vector<1x24x128xf32> to vector<24x128xf32>
      %30 = vector.extract_strided_slice %29 {offsets = [0, 32], sizes = [24, 1], strides = [1, 1]} : vector<24x128xf32> to vector<24x1xf32>
      %31 = vector.broadcast %30 : vector<24x1xf32> to vector<24x128xf32>
      %32 = arith.divf %29, %31 : vector<24x128xf32>
      %c0_20 = arith.constant 0 : index
      %c0_21 = arith.constant 0 : index
      %c0_22 = arith.constant 0 : index
      %33 = vector.load %arg6[%c0_20, %c0_21, %c0_22] : memref<1x24x128xf32, #tpu.memory_space<vmem>>, vector<1x24x128xf32>
      %34 = vector.shape_cast %33 : vector<1x24x128xf32> to vector<24x128xf32>
      %35 = vector.shape_cast %32 : vector<24x128xf32> to vector<1x24x128xf32>
      tpu.vector_store %arg6[%c0_20, %c0_21, %c0_22], %35 {strides = array<i32>} : memref<1x24x128xf32, #tpu.memory_space<vmem>>, vector<1x24x128xf32>,
    } else {
    }
    return
  }
  func.func @transform_0(%arg0: i32, %arg1: i32, %arg2: i32) -> (i32, i32) {
    %c0_i32 = arith.constant 0 : i32
    %c0_i32_0 = arith.constant 0 : i32
    return %c0_i32, %arg2 : i32, i32
  }
  func.func @transform_1(%arg0: i32, %arg1: i32, %arg2: i32) -> (i32, i32, i32) {
    %c0_i32 = arith.constant 0 : i32
    %c0_i32_0 = arith.constant 0 : i32
    return %arg0, %c0_i32, %arg2 : i32, i32, i32
  }
  func.func @transform_2(%arg0: i32, %arg1: i32, %arg2: i32) -> (i32, i32, i32) {
    %c0_i32 = arith.constant 0 : i32
    %c0_i32_0 = arith.constant 0 : i32
    return %arg0, %arg2, %c0_i32 : i32, i32, i32
  }
  func.func @transform_3(%arg0: i32, %arg1: i32, %arg2: i32) -> (i32, i32, i32) {
    %c0_i32 = arith.constant 0 : i32
    %c0_i32_0 = arith.constant 0 : i32
    return %arg0, %arg1, %c0_i32 : i32, i32, i32
  }
}

</mosaic_0001>

<llo_original>
// kernel: tpu_custom_call.1
$region0: #{tpu_custom_call.1}
  #allocation0 [shape = 'u32[]', space=smem, size = 0x4, offset = 0x4, fixed_abs, tag = 'smem constant byte address 0x4 - core index']
  #allocation1 [shape = 'u32[144,128]{1,0:T(1,128)}', space=vmem, size = 0x12000, scoped, tag = 'internal scratch']
  %s0 = inlined_call_operand.hbm [shape: s32[1,128], index: 0, kind: input, shape index: {}]
  %s1 = inlined_call_operand.hbm [shape: f32[2,1,128], index: 1, kind: input, shape index: {}]
  %s2 = inlined_call_operand.hbm [shape: f32[2,128,128], index: 2, kind: input, shape index: {}]
  %s3 = inlined_call_operand.hbm [shape: f32[2,24,128], index: 3, kind: output, shape index: {}]
  %s4 = sld [smem:[#allocation0]]
  $region65: #{tpu_custom_call.1} parent=0
    _
  %s6 = ssub.s32 1, %s4
  %s7 = scalar_select 0, %s6, %s4
  $region1: #{tpu_custom_call.1} parent=0
    #allocation2 [shape = 'u8[512]{0}', space=vmem, size = 0x400, scoped, tag = 'input window, operand 0, single buffered']
    #allocation3 [shape = 's32[2]{0}', space=sflag, size = 0x8, scoped, tag = 'scoped memory for tpu_custom_call.1']
    #allocation4 [shape = 's32[2]{0}', space=sflag, size = 0x8, scoped, tag = 'scoped memory for tpu_custom_call.1']
    #allocation5 [shape = 'u8[1024]{0}', space=vmem, size = 0x400, scoped, tag = 'input window, operand 1']
    #allocation6 [shape = 's32[2]{0}', space=sflag, size = 0x8, scoped, tag = 'scoped memory for tpu_custom_call.1']
    #allocation7 [shape = 'u8[131072]{0}', space=vmem, size = 0x20000, scoped, tag = 'input window, operand 2']
    #allocation8 [shape = 'u8[24576]{0}', space=vmem, size = 0x6000, scoped, tag = 'output window, operand 0']
    %8 = vsyncpa [#allocation3], 0
    %9 = vsyncpa [#allocation6], 0
    %s10 = scalar_lea.sflag [#allocation6], 1
    %11 = vsyncpa %s10, 0
    %12 = vsyncpa [#allocation4], 0
    %s13 = scalar_lea.sflag [#allocation4], 1
    %14 = vsyncpa %s13, 0
    loop: start=0, step=1, limit=4
    $region2: #{tpu_custom_call.1} parent=1 // loop_pre_header
      _
    $region3: #{tpu_custom_call.1} parent=1 // loop_header
      %s16 = sphi 0, %s20
      %p17 = scmp.ge.s32.totalorder %s16, 4
      %s23 = sphi 0, %s42
      %s24 = sphi 0, %s38
      %s25 = sphi 0, %s34
      %s26 = sphi 0, %s23
      %s27 = sphi 0, %s24
      %s28 = sphi 0, %s25
      %s29 = sphi 0, %s26
      %s30 = sphi 0, %s27
      %s31 = sphi 0, %s28
      %s45 = sphi 0, %s47
      %s48 = sphi 0, %s45
      %s49 = sphi 0, %s48
      %s65 = sphi 0, %s49
      %s73 = sphi 0, %s75
      %s76 = sphi 0, %s73
      %s77 = sphi 0, %s76
      %s93 = sphi 0, %s77
      %s101 = sphi 0, %s103
      %s104 = sphi 0, %s101
      %s105 = sphi 0, %s104
      %s121 = sphi 0, %s105
      %s129 = sphi 0, %s131
      %s132 = sphi 0, %s129
      %s133 = sphi 0, %s132
      %s149 = sphi 0, %s133
    $region4: #{tpu_custom_call.1} parent=1 // loop_header_branch
      %19 = sbr.rel (%p17) target = $region8
    $region5: #{tpu_custom_call.1} parent=1 // loop_body
      %s21 = ssub.s32 %s16, 1
      %s22 = ssub.s32 %s16, 2
      %s32 = sadd.s32 1, %s25
      %p33 = scmp.ge.s32.totalorder %s32, 1
      %s34 = scalar_select %p33, 0, %s32
      %s35 = sadd.s32 1, %s24
      %s36 = scalar_select %p33, %s35, %s24
      %p37 = scmp.ge.s32.totalorder %s36, 1
      %s38 = scalar_select %p37, 0, %s36
      %s39 = sadd.s32 1, %s23
      %s40 = scalar_select %p37, %s39, %s23
      %p41 = scmp.ge.s32.totalorder %s40, 2
      %s42 = scalar_select %p41, 0, %s40
      %s43 = ssub.s32 %s25, %s34
      %p44 = scmp.eq.s32.totalorder %s43, 0
      %s46 = sadd.s32 %s45, 1
      %s47 = scalar_select %p44, %s45, %s46
      %p50 = pneg %p44
      %p51 = scmp.eq.s32.totalorder %s16, 1
      %p52 = por %p50, %p51
      %p53 = scmp.ne.s32.totalorder %s45, %s48
      %p54 = scmp.eq.s32.totalorder %s16, 0
      %p55 = por %p53, %p54
      %p56 = scmp.ne.s32.totalorder %s45, %s48
      %p57 = scmp.eq.s32.totalorder %s21, 1
      %p58 = por %p56, %p57
      %p59 = scmp.ne.s32.totalorder %s48, %s49
      %p60 = scmp.eq.s32.totalorder %s21, 0
      %p61 = por %p59, %p60
      %p62 = scmp.ne.s32.totalorder %s48, %s49
      %p63 = scmp.eq.s32.totalorder %s22, 1
      %p64 = por %p62, %p63
      %p66 = scmp.ne.s32.totalorder %s49, %s65
      %p67 = scmp.eq.s32.totalorder %s22, 0
      %p68 = por %p66, %p67
      %s69 = ssub.s32 %s23, %s42
      %s70 = ssub.s32 %s25, %s34
      %s71 = sor.u32 %s69, %s70
      %p72 = scmp.eq.s32.totalorder %s71, 0
      %s74 = sadd.s32 %s73, 1
      %s75 = scalar_select %p72, %s73, %s74
      %p78 = pneg %p72
      %p79 = scmp.eq.s32.totalorder %s16, 1
      %p80 = por %p78, %p79
      %p81 = scmp.ne.s32.totalorder %s73, %s76
      %p82 = scmp.eq.s32.totalorder %s16, 0
      %p83 = por %p81, %p82
      %p84 = scmp.ne.s32.totalorder %s73, %s76
      %p85 = scmp.eq.s32.totalorder %s21, 1
      %p86 = por %p84, %p85
      %p87 = scmp.ne.s32.totalorder %s76, %s77
      %p88 = scmp.eq.s32.totalorder %s21, 0
      %p89 = por %p87, %p88
      %p90 = scmp.ne.s32.totalorder %s76, %s77
      %p91 = scmp.eq.s32.totalorder %s22, 1
      %p92 = por %p90, %p91
      %p94 = scmp.ne.s32.totalorder %s77, %s93
      %p95 = scmp.eq.s32.totalorder %s22, 0
      %p96 = por %p94, %p95
      %s97 = ssub.s32 %s23, %s42
      %s98 = ssub.s32 %s25, %s34
      %s99 = sor.u32 %s97, %s98
      %p100 = scmp.eq.s32.totalorder %s99, 0
      %s102 = sadd.s32 %s101, 1
      %s103 = scalar_select %p100, %s101, %s102
      %p106 = pneg %p100
      %p107 = scmp.eq.s32.totalorder %s16, 1
      %p108 = por %p106, %p107
      %p109 = scmp.ne.s32.totalorder %s101, %s104
      %p110 = scmp.eq.s32.totalorder %s16, 0
      %p111 = por %p109, %p110
      %p112 = scmp.ne.s32.totalorder %s101, %s104
      %p113 = scmp.eq.s32.totalorder %s21, 1
      %p114 = por %p112, %p113
      %p115 = scmp.ne.s32.totalorder %s104, %s105
      %p116 = scmp.eq.s32.totalorder %s21, 0
      %p117 = por %p115, %p116
      %p118 = scmp.ne.s32.totalorder %s104, %s105
      %p119 = scmp.eq.s32.totalorder %s22, 1
      %p120 = por %p118, %p119
      %p122 = scmp.ne.s32.totalorder %s105, %s121
      %p123 = scmp.eq.s32.totalorder %s22, 0
      %p124 = por %p122, %p123
      %s125 = ssub.s32 %s23, %s42
      %s126 = ssub.s32 %s24, %s38
      %s127 = sor.u32 %s125, %s126
      %p128 = scmp.eq.s32.totalorder %s127, 0
      %s130 = sadd.s32 %s129, 1
      %s131 = scalar_select %p128, %s129, %s130
      %p134 = pneg %p128
      %p135 = scmp.eq.s32.totalorder %s16, 1
      %p136 = por %p134, %p135
      %p137 = scmp.ne.s32.totalorder %s129, %s132
      %p138 = scmp.eq.s32.totalorder %s16, 0
      %p139 = por %p137, %p138
      %p140 = scmp.ne.s32.totalorder %s129, %s132
      %p141 = scmp.eq.s32.totalorder %s21, 1
      %p142 = por %p140, %p141
      %p143 = scmp.ne.s32.totalorder %s132, %s133
      %p144 = scmp.eq.s32.totalorder %s21, 0
      %p145 = por %p143, %p144
      %p146 = scmp.ne.s32.totalorder %s132, %s133
      %p147 = scmp.eq.s32.totalorder %s22, 1
      %p148 = por %p146, %p147
      %p150 = scmp.ne.s32.totalorder %s133, %s149
      %p151 = scmp.eq.s32.totalorder %s22, 0
      %p152 = por %p150, %p151
      %p153 = scmp.le.s32.totalorder 1, %s16
      %p154 = scmp.lt.s32.totalorder %s16, 3
      %p155 = pnand %p153, %p154
      %p156 = pneg %p155
      // Predicated region
      $region9: #{tpu_custom_call.1} parent=5 // pred_check
        _
      $region10: #{tpu_custom_call.1} parent=5 // pred_check_branch
        %158 = sbr.rel (%p155) target = $region12
      $region11: #{tpu_custom_call.1} parent=5 // pred_region
        %s159 = ssub.s32 %s16, 1
        // Predicated region
        $region13: #{tpu_custom_call.1} parent=11 // pred_check
          %p160 = pneg %p61
        $region14: #{tpu_custom_call.1} parent=11 // pred_check_branch
          %162 = sbr.rel (%p160) target = $region16
        $region15: #{tpu_custom_call.1} parent=11 // pred_region
          %s164 = ssub.s32 16, 16
          %165 = vsyncadd [#allocation3], %s164
          %s166 = smul.addr %s28, 16
          %s167 = scalar_lea.hbm %s0, %s166
          %s169 = sshll.u32 [#allocation2], 4
          %s170 = int_to_ptr.vmem [resolvable:$true] %s169
          %172 = dma.hbm_to_vmem [thread:$0]  %s167, 16, %s170, [#allocation3]
        $region16: #{tpu_custom_call.1} parent=11 // pred_fallthru
          _
      $region12: #{tpu_custom_call.1} parent=5 // pred_fallthru
        _
      %p173 = scmp.lt.s32.totalorder %s16, 2
      // Predicated region
      $region17: #{tpu_custom_call.1} parent=5 // pred_check
        %p174 = pneg %p173
      $region18: #{tpu_custom_call.1} parent=5 // pred_check_branch
        %176 = sbr.rel (%p174) target = $region20
      $region19: #{tpu_custom_call.1} parent=5 // pred_region
        // Predicated region
        $region21: #{tpu_custom_call.1} parent=19 // pred_check
          %p177 = pneg %p83
        $region22: #{tpu_custom_call.1} parent=19 // pred_check_branch
          %179 = sbr.rel (%p177) target = $region24
        $region23: #{tpu_custom_call.1} parent=19 // pred_region
          %s180 = sand.u32 %s16, 1
          %s181 = scalar_lea.sflag [#allocation6], %s180
          %s182 = sand.u32 %s73, 1
          %s183 = scalar_lea.vmem [#allocation5], %s182
          %s185 = ssub.s32 16, 16
          %186 = vsyncadd %s181, %s185
          %s187 = sadd.s32 %s25, %s23
          %s188 = smul.addr %s187, 16
          %s189 = scalar_lea.hbm %s1, %s188
          %s191 = sshll.u32 %s183, 4
          %s192 = int_to_ptr.vmem [resolvable:$true] %s191
          %194 = dma.hbm_to_vmem [thread:$0]  %s189, 16, %s192, %s181
        $region24: #{tpu_custom_call.1} parent=19 // pred_fallthru
          _
        // Predicated region
        $region25: #{tpu_custom_call.1} parent=19 // pred_check
          %p195 = pneg %p111
        $region26: #{tpu_custom_call.1} parent=19 // pred_check_branch
          %197 = sbr.rel (%p195) target = $region28
        $region27: #{tpu_custom_call.1} parent=19 // pred_region
          %s198 = sand.u32 %s16, 1
          %s199 = scalar_lea.sflag [#allocation6], %s198
          %s200 = sand.u32 %s101, 1
          %s201 = smul.addr %s200, 128
          %s202 = scalar_lea.vmem [#allocation7], %s201
          %s203 = smul.u32 16, %s25
          %s205 = ssub.s32 2048, 2048
          %206 = vsyncadd %s199, %s205
          %s207 = smul.addr %s23, 16
          %s208 = sadd.s32 %s203, %s207
          %s209 = smul.addr %s208, 128
          %s210 = scalar_lea.hbm %s2, %s209
          %s211 = sshll.u32 %s202, 4
          %s212 = int_to_ptr.vmem [resolvable:$true] %s211
          %217 = dma.hbm_to_vmem [thread:$0]  %s210, 2048, %s212, %s199, 128, 128, 8
        $region28: #{tpu_custom_call.1} parent=19 // pred_fallthru
          _
      $region20: #{tpu_custom_call.1} parent=5 // pred_fallthru
        _
      %p218 = scmp.le.s32.totalorder 1, %s16
      %p219 = scmp.lt.s32.totalorder %s16, 3
      %p220 = pnand %p218, %p219
      %p221 = pneg %p220
      // Predicated region
      $region29: #{tpu_custom_call.1} parent=5 // pred_check
        _
      $region30: #{tpu_custom_call.1} parent=5 // pred_check_branch
        %223 = sbr.rel (%p220) target = $region32
      $region31: #{tpu_custom_call.1} parent=5 // pred_region
        %s224 = ssub.s32 %s16, 1
        // Predicated region
        $region33: #{tpu_custom_call.1} parent=31 // pred_check
          %p225 = pneg %p61
        $region34: #{tpu_custom_call.1} parent=31 // pred_check_branch
          %227 = sbr.rel (%p225) target = $region36
        $region35: #{tpu_custom_call.1} parent=31 // pred_region
          %228 = dma.done [#allocation3], 16
        $region36: #{tpu_custom_call.1} parent=31 // pred_fallthru
          _
        %s229 = sand.u32 %s21, 1
        %s230 = scalar_lea.sflag [#allocation6], %s229
        %s231 = sand.u32 %s76, 1
        %s232 = scalar_lea.vmem [#allocation5], %s231
        // Predicated region
        $region37: #{tpu_custom_call.1} parent=31 // pred_check
          %p233 = pneg %p89
        $region38: #{tpu_custom_call.1} parent=31 // pred_check_branch
          %235 = sbr.rel (%p233) target = $region40
        $region39: #{tpu_custom_call.1} parent=31 // pred_region
          %236 = dma.done %s230, 16
        $region40: #{tpu_custom_call.1} parent=31 // pred_fallthru
          _
        %s237 = sand.u32 %s21, 1
        %s238 = scalar_lea.sflag [#allocation6], %s237
        %s239 = sand.u32 %s104, 1
        %s240 = smul.addr %s239, 128
        %s241 = scalar_lea.vmem [#allocation7], %s240
        // Predicated region
        $region41: #{tpu_custom_call.1} parent=31 // pred_check
          %p242 = pneg %p117
        $region42: #{tpu_custom_call.1} parent=31 // pred_check_branch
          %244 = sbr.rel (%p242) target = $region44
        $region43: #{tpu_custom_call.1} parent=31 // pred_region
          %245 = dma.done %s238, 2048
        $region44: #{tpu_custom_call.1} parent=31 // pred_fallthru
          _
        %p246 = pneg %p61
        %p247 = pneg %p58
        %s248 = sand.u32 %s21, 1
        %s249 = scalar_lea.sflag [#allocation6], %s248
        %s250 = sand.u32 %s76, 1
        %s251 = scalar_lea.vmem [#allocation5], %s250
        %p252 = pneg %p89
        %p253 = pneg %p86
        %s254 = sand.u32 %s21, 1
        %s255 = scalar_lea.sflag [#allocation6], %s254
        %s256 = sand.u32 %s104, 1
        %s257 = smul.addr %s256, 128
        %s258 = scalar_lea.vmem [#allocation7], %s257
        %p259 = pneg %p117
        %p260 = pneg %p114
        %p261 = pneg %p145
        %p262 = pneg %p142
        %s263 = sand.u32 %s132, 1
        %s264 = scalar_lea.sflag [#allocation4], %s263
        %s265 = sand.u32 %s132, 1
        %s266 = smul.addr %s265, 24
        %s267 = scalar_lea.vmem [#allocation8], %s266
        %s268 = smul.u32 16, %s28
        %s269 = smul.u32 3, %s27
        %p270 = scmp.eq.s32.totalorder %s28, 0
        // Predicated region
        $region45: #{tpu_custom_call.1} parent=31 // pred_check
          %p271 = pneg %p270
        $region46: #{tpu_custom_call.1} parent=31 // pred_check_branch
          %273 = sbr.rel (%p271) target = $region48
        $region47: #{tpu_custom_call.1} parent=31 // pred_region
          %274 = vst [vmem:[%s267] sm:$0xff] 0.0
          %275 = vst [vmem:[%s267 + $0x8] sm:$0xff] 0.0
          %276 = vst [vmem:[%s267 + $0x10] sm:$0xff] 0.0
        $region48: #{tpu_custom_call.1} parent=31 // pred_fallthru
          _
        %v277 = vld [vmem:[#allocation2] sm:$0x1]
        %v278 = vld [vmem:[%s232] sm:$0x1]
        %s279 = smul.u32 %s27, 24
        %v280 = vlaneseq
        %v281 = vshrl.u32 %v280, 7
        %v282 = vadd.s32 %v281, 8
        %v283 = vadd.s32 %v281, 16
        %v284 = vstv %s279
        %v285 = vadd.s32 %v284, %v281
        %v286 = vadd.s32 %v284, %v282
        %v287 = vadd.s32 %v284, %v283
        %v288 = vlaneseq
        %v289 = vshrl.u32 %v288, 7
        %v290 = vsub.s32 0, %v289
        %v291 = vrot.slane %v277, %v290
        %vm292 = vcmp.eq.s32.totalorder %v285, %v291
        %vm293 = vcmp.eq.s32.totalorder %v286, %v291
        %vm294 = vcmp.eq.s32.totalorder %v287, %v291
        %v296 = vlaneseq
        %v297 = vshrl.u32 %v296, 7
        %v298 = vsub.s32 0, %v297
        %v299 = vrot.slane %v278, %v298
        %v301 = vsel %vm292, %v299, 0.0
        %v302 = vsel %vm293, %v299, 0.0
        %v303 = vsel %vm294, %v299, 0.0
        %v304 = vld [vmem:[%s267] sm:$0xff]
        %v305 = vld [vmem:[%s267 + $0x8] sm:$0xff]
        %v306 = vld [vmem:[%s267 + $0x10] sm:$0xff]
        %v307 = vld [vmem:[%s241] sm:$0xff]
        %v308 = vld [vmem:[%s241 + $0x8] sm:$0xff]
        %v309 = vld [vmem:[%s241 + $0x10] sm:$0xff]
        %v310 = vld [vmem:[%s241 + $0x18] sm:$0xff]
        %v311 = vld [vmem:[%s241 + $0x20] sm:$0xff]
        %v312 = vld [vmem:[%s241 + $0x28] sm:$0xff]
        %v313 = vld [vmem:[%s241 + $0x30] sm:$0xff]
        %v314 = vld [vmem:[%s241 + $0x38] sm:$0xff]
        %v315 = vld [vmem:[%s241 + $0x40] sm:$0xff]
        %v316 = vld [vmem:[%s241 + $0x48] sm:$0xff]
        %v317 = vld [vmem:[%s241 + $0x50] sm:$0xff]
        %v318 = vld [vmem:[%s241 + $0x58] sm:$0xff]
        %v319 = vld [vmem:[%s241 + $0x60] sm:$0xff]
        %v320 = vld [vmem:[%s241 + $0x68] sm:$0xff]
        %v321 = vld [vmem:[%s241 + $0x70] sm:$0xff]
        %v322 = vld [vmem:[%s241 + $0x78] sm:$0xff]
        %323 = vmatprep.subr.mxu0 0.0
        %324 = vmatpush1.msra.mxu0 %v322
        %325 = vmatprep.subr.mxu0 0.0
        %326 = vmatpush1.msra.mxu0 %v321
        %327 = vmatprep.subr.mxu0 0.0
        %328 = vmatpush1.msra.mxu0 %v320
        %329 = vmatprep.subr.mxu0 0.0
        %330 = vmatpush1.msra.mxu0 %v319
        %331 = vmatprep.subr.mxu0 0.0
        %332 = vmatpush1.msra.mxu0 %v318
        %333 = vmatprep.subr.mxu0 0.0
        %334 = vmatpush1.msra.mxu0 %v317
        %335 = vmatprep.subr.mxu0 0.0
        %336 = vmatpush1.msra.mxu0 %v316
        %337 = vmatprep.subr.mxu0 0.0
        %338 = vmatpush1.msra.mxu0 %v315
        %339 = vmatprep.subr.mxu0 0.0
        %340 = vmatpush1.msra.mxu0 %v314
        %341 = vmatprep.subr.mxu0 0.0
        %342 = vmatpush1.msra.mxu0 %v313
        %343 = vmatprep.subr.mxu0 0.0
        %344 = vmatpush1.msra.mxu0 %v312
        %345 = vmatprep.subr.mxu0 0.0
        %346 = vmatpush1.msra.mxu0 %v311
        %347 = vmatprep.subr.mxu0 0.0
        %348 = vmatpush1.msra.mxu0 %v310
        %349 = vmatprep.subr.mxu0 0.0
        %350 = vmatpush1.msra.mxu0 %v309
        %351 = vmatprep.subr.mxu0 0.0
        %352 = vmatpush1.msra.mxu0 %v308
        %353 = vmatprep.subr.mxu0 0.0
        %354 = vmatpush1.msra.mxu0 %v307
        %355 = vmatprep.subr.mxu0 0.0
        %356 = vmatpush2.msra.mxu0 0.0
        %357 = vmatprep.subr.mxu0 0.0
        %358 = vmatpush2.msra.mxu0 0.0
        %359 = vmatprep.subr.mxu0 0.0
        %360 = vmatpush2.msra.mxu0 0.0
        %361 = vmatprep.subr.mxu0 0.0
        %362 = vmatpush2.msra.mxu0 0.0
        %363 = vmatprep.subr.mxu0 0.0
        %364 = vmatpush2.msra.mxu0 0.0
        %365 = vmatprep.subr.mxu0 0.0
        %366 = vmatpush2.msra.mxu0 0.0
        %367 = vmatprep.subr.mxu0 0.0
        %368 = vmatpush2.msra.mxu0 0.0
        %369 = vmatprep.subr.mxu0 0.0
        %370 = vmatpush2.msra.mxu0 0.0
        %371 = vmatprep.subr.mxu0 0.0
        %372 = vmatpush2.msra.mxu0 0.0
        %373 = vmatprep.subr.mxu0 0.0
        %374 = vmatpush2.msra.mxu0 0.0
        %375 = vmatprep.subr.mxu0 0.0
        %376 = vmatpush2.msra.mxu0 0.0
        %377 = vmatprep.subr.mxu0 0.0
        %378 = vmatpush2.msra.mxu0 0.0
        %379 = vmatprep.subr.mxu0 0.0
        %380 = vmatpush2.msra.mxu0 0.0
        %381 = vmatprep.subr.mxu0 0.0
        %382 = vmatpush2.msra.mxu0 0.0
        %383 = vmatprep.subr.mxu0 0.0
        %384 = vmatpush2.msra.mxu0 0.0
        %385 = vmatprep.subr.mxu0 0.0
        %386 = vmatpush2.msra.mxu0 0.0
        %387 = vmatprep.mubr.f32.mxu0 0.0
        %388 = vmatmul.mubr.f32.gmra.mxu0 %v301
        %v389 = vpop.f32.mrf.mxu0
        %v390 = vadd.f32 0.0, %v389
        %v391 = vpop.f32.mrf.mxu0
        %392 = vmatprep.mubr.f32.mxu0 0.0
        %393 = vmatmul.mubr.f32.gmra.mxu0 %v302
        %v394 = vpop.f32.mrf.mxu0
        %v395 = vadd.f32 0.0, %v394
        %v396 = vpop.f32.mrf.mxu0
        %397 = vmatprep.mubr.f32.mxu0 0.0
        %398 = vmatmul.mubr.f32.gmra.mxu0 %v303
        %v399 = vpop.f32.mrf.mxu0
        %v400 = vadd.f32 0.0, %v399
        %v401 = vpop.f32.mrf.mxu0
        %402 = vdwg.mxu0
        %v403 = vadd.f32 %v304, %v390
        %v404 = vadd.f32 %v305, %v395
        %v405 = vadd.f32 %v306, %v400
        %406 = vst [vmem:[%s267] sm:$0xff] %v403
        %407 = vst [vmem:[%s267 + $0x8] sm:$0xff] %v404
        %408 = vst [vmem:[%s267 + $0x10] sm:$0xff] %v405
        // Predicated region
        $region49: #{tpu_custom_call.1} parent=31 // pred_check
          %p409 = pneg %p270
        $region50: #{tpu_custom_call.1} parent=31 // pred_check_branch
          %411 = sbr.rel (%p409) target = $region52
        $region51: #{tpu_custom_call.1} parent=31 // pred_region
          %v412 = vld [vmem:[%s267] sm:$0xff]
          %v413 = vld [vmem:[%s267 + $0x8] sm:$0xff]
          %v414 = vld [vmem:[%s267 + $0x10] sm:$0xff]
          %416 = vset.pattern.permute.xlu0 32
          %417 = vperm.xlu0 %416, %v412
          %v418 = vpop.permute.xlu0 %417
          %421 = vset.pattern.permute.xlu0 32
          %422 = vperm.xlu0 %421, %v413
          %v423 = vpop.permute.xlu0 %422
          %426 = vset.pattern.permute.xlu0 32
          %427 = vperm.xlu0 %426, %v414
          %v428 = vpop.permute.xlu0 %427
          %v430 = vrcp.pop %v418
          %v431 = vmul.f32 %v412, %v430
          %v432 = vrcp.pop %v423
          %v433 = vmul.f32 %v413, %v432
          %v434 = vrcp.pop %v428
          %v435 = vmul.f32 %v414, %v434
          %436 = vst [vmem:[%s267] sm:$0xff] %v431
          %437 = vst [vmem:[%s267 + $0x8] sm:$0xff] %v433
          %438 = vst [vmem:[%s267 + $0x10] sm:$0xff] %v435
        $region52: #{tpu_custom_call.1} parent=31 // pred_fallthru
          _
        %s439 = sand.u32 %s132, 1
        %s440 = scalar_lea.sflag [#allocation4], %s439
        %s441 = sand.u32 %s132, 1
        %s442 = smul.addr %s441, 24
        %s443 = scalar_lea.vmem [#allocation8], %s442
        // Predicated region
        $region53: #{tpu_custom_call.1} parent=31 // pred_check
          %p444 = pneg %p142
        $region54: #{tpu_custom_call.1} parent=31 // pred_check_branch
          %446 = sbr.rel (%p444) target = $region56
        $region55: #{tpu_custom_call.1} parent=31 // pred_region
          %s447 = smul.u32 3, %s27
          %s449 = ssub.s32 384, 384
          %450 = vsyncadd %s440, %s449
          %s451 = smul.addr %s26, 3
          %s452 = sadd.s32 %s447, %s451
          %s453 = smul.addr %s452, 128
          %s454 = scalar_lea.hbm %s3, %s453
          %s455 = sshll.u32 %s443, 4
          %s456 = int_to_ptr.vmem [resolvable:$true] %s455
          %461 = dma.vmem_to_hbm [thread:$0]  %s456, 384, %s454, %s440, 128, 128, 8
        $region56: #{tpu_custom_call.1} parent=31 // pred_fallthru
          _
      $region32: #{tpu_custom_call.1} parent=5 // pred_fallthru
        _
      %p462 = scmp.le.s32.totalorder 2, %s16
      // Predicated region
      $region57: #{tpu_custom_call.1} parent=5 // pred_check
        %p463 = pneg %p462
      $region58: #{tpu_custom_call.1} parent=5 // pred_check_branch
        %465 = sbr.rel (%p463) target = $region60
      $region59: #{tpu_custom_call.1} parent=5 // pred_region
        %s466 = ssub.s32 %s16, 2
        // Predicated region
        $region61: #{tpu_custom_call.1} parent=59 // pred_check
          %p467 = pneg %p148
        $region62: #{tpu_custom_call.1} parent=59 // pred_check_branch
          %469 = sbr.rel (%p467) target = $region64
        $region63: #{tpu_custom_call.1} parent=59 // pred_region
          %s470 = sand.u32 %s133, 1
          %s471 = scalar_lea.sflag [#allocation4], %s470
          %s472 = sand.u32 %s133, 1
          %s473 = smul.addr %s472, 24
          %s474 = scalar_lea.vmem [#allocation8], %s473
          %475 = dma.done %s471, 384
        $region64: #{tpu_custom_call.1} parent=59 // pred_fallthru
          _
      $region60: #{tpu_custom_call.1} parent=5 // pred_fallthru
        _
    $region6: #{tpu_custom_call.1} parent=1 // loop_footer
      %s20 = sadd.s32 1, %s16
    $region7: #{tpu_custom_call.1} parent=1 // loop_footer_branch
      %15 = sbr.rel target = $region3
    $region8: #{tpu_custom_call.1} parent=1 // loop_exit
      _
    %476 = vsyncpa [#allocation3], 1
    %s477 = scalar_lea.sflag [#allocation3], 1
    %478 = vsyncpa %s477, 1
    %479 = vsyncpa [#allocation6], 1
    %s480 = scalar_lea.sflag [#allocation6], 1
    %481 = vsyncpa %s480, 1
    %482 = vsyncpa [#allocation4], 1
    %s483 = scalar_lea.sflag [#allocation4], 1
    %484 = vsyncpa %s483, 1

</llo_original>
